<compile_context>
chip_gen: v5e
topology: v5e:2x2
jax: 0.10.0
libtpu: 0.0.40
codegen_flags: <defaults>
</compile_context>

<pallas_src>
import functools
import math

import jax
import jax.numpy as jnp
from jax.experimental import pallas as pl
from jax.experimental.pallas import tpu as pltpu


# ----------------------------- config ---------------------------------------
class SigLipVisionConfig:
    def __init__(self, hidden_size=768, intermediate_size=3072,
                 num_hidden_layers=12, num_attn_heads=12, num_channels=3,
                 image_size=224, patch_size=16, layer_norm_eps=1e-6,
                 attn_dropout=0.0, num_image_tokens=None, **kwargs):
        self.hidden_size = hidden_size
        self.intermediate_size = intermediate_size
        self.num_hidden_layers = num_hidden_layers
        self.num_attn_heads = num_attn_heads
        self.num_channels = num_channels
        self.image_size = image_size
        self.patch_size = patch_size
        self.layer_norm_eps = layer_norm_eps
        self.attn_dropout = attn_dropout       # eval mode -> dropout is a no-op
        self.num_image_tokens = num_image_tokens


# Row order of the packed per-layer (9, D) vector bundle.
_LN1_G, _LN1_B, _BQ, _BK, _BV, _BO, _LN2_G, _LN2_B, _B2 = range(9)


# ----------------------------- kernel helpers --------------------------------
def _gelu_tanh(x):
    # PyTorch nn.functional.gelu(..., approximate='tanh')
    c = math.sqrt(2.0 / math.pi)
    return 0.5 * x * (1.0 + jnp.tanh(c * (x + 0.044715 * x * x * x)))


def _layernorm(x, g, b, eps):
    mu = jnp.mean(x, axis=-1, keepdims=True)
    var = jnp.mean((x - mu) ** 2, axis=-1, keepdims=True)
    return (x - mu) * jax.lax.rsqrt(var + eps) * g + b


# ----------------------------- kernels ---------------------------------------
def patch_embed_kernel(patches_ref, w_ref, b_ref, pos_ref, out_ref):
    # patches_ref: (Bblk, S, C*P*P) f32; w_ref: (C*P*P, D) bf16
    # b_ref: (1, D); pos_ref: (S, D); out_ref: (Bblk, S, D) f32
    bblk, S, CPP = patches_ref.shape
    D = w_ref.shape[1]
    p = patches_ref[...].reshape(bblk * S, CPP).astype(w_ref.dtype)
    emb = jnp.dot(p, w_ref[...], preferred_element_type=jnp.float32)
    emb = emb.reshape(bblk, S, D)
    out_ref[...] = (emb + b_ref[...].astype(jnp.float32)
                    + pos_ref[...].astype(jnp.float32)).astype(out_ref.dtype)


def encoder_stack_kernel(x_ref,
                         wq_ref, wk_ref, wv_ref, wo_ref, w1_ref, w2_ref,
                         vec_ref, b1_ref, post_ref,
                         out_ref, act_ref, *, num_heads, eps):
    # grid = (batch_blocks, layer); the batch-block activation lives flattened
    # as (Bblk*S, D) in VMEM scratch across layers (no HBM round trips).
    l = pl.program_id(1)
    n_layers = pl.num_programs(1)

    bblk, S, D = x_ref.shape
    M = bblk * S
    hd = D // num_heads
    scale = hd ** (-0.5)
    cdt = wq_ref.dtype                        # bf16 compute dtype (MXU-native)

    @pl.when(l == 0)
    def _():
        act_ref[...] = x_ref[...].reshape(M, D)      # f32 residual stream

    x = act_ref[...]                                  # (M, D) f32

    vecs = vec_ref[...].astype(jnp.float32)           # (9, D) packed vectors
    ln1_g, ln1_b = vecs[_LN1_G], vecs[_LN1_B]
    bq, bk, bv, bo = vecs[_BQ], vecs[_BK], vecs[_BV], vecs[_BO]
    ln2_g, ln2_b, b2 = vecs[_LN2_G], vecs[_LN2_B], vecs[_B2]
    b1 = b1_ref[...].astype(jnp.float32)               # (1, I)

    # ---- LayerNorm 1 + QKV projections (all tokens of the batch block) ----
    h = _layernorm(x, ln1_g, ln1_b, eps).astype(cdt)
    q = jnp.dot(h, wq_ref[...], preferred_element_type=jnp.float32) + bq
    k = jnp.dot(h, wk_ref[...], preferred_element_type=jnp.float32) + bk
    v = jnp.dot(h, wv_ref[...], preferred_element_type=jnp.float32) + bv

    # ---- self-attention: per image in the batch block, heads batched ----
    # TODO(synk): hd < 128 splits the lane dim (relayouts); switch to head-major
    #   weights or kv-tiled flash attention before production sizes.
    def to_heads(t):
        t = t.astype(cdt).reshape(bblk, S, num_heads, hd)
        return t.transpose(0, 2, 1, 3).reshape(bblk * num_heads, S, hd)

    qh, kh, vh = to_heads(q), to_heads(k), to_heads(v)
    s = jnp.einsum("bqd,bkd->bqk", qh, kh,
                   preferred_element_type=jnp.float32) * scale   # (Bblk*H, S, S)
    s = s - jnp.max(s, axis=-1, keepdims=True)
    p = jnp.exp(s)
    denom = jnp.sum(p, axis=-1, keepdims=True)
    r = pl.reciprocal(denom, approx=True)             # EUP vrcp
    r = r * (2.0 - denom * r)                         # one Newton step
    p = (p * r).astype(cdt)
    # TODO(synk): attention dropout (p=0.0, eval mode) intentionally omitted.

    o = jnp.einsum("bqk,bkd->bqd", p, vh,
                   preferred_element_type=jnp.float32)           # (Bblk*H, S, hd)
    o = o.reshape(bblk, num_heads, S, hd).transpose(0, 2, 1, 3).reshape(M, D)
    attn = jnp.dot(o.astype(cdt), wo_ref[...],
                   preferred_element_type=jnp.float32) + bo

    h1 = x + attn                                                # residual 1

    # ---- LayerNorm 2 + MLP ----
    # TODO(synk): tile the MLP over I-chunks (fc2 partial-sum accumulator)
    #   before running production sizes on v7x (64 MiB VMEM).
    h2 = _layernorm(h1, ln2_g, ln2_b, eps).astype(cdt)
    m = jnp.dot(h2, w1_ref[...], preferred_element_type=jnp.float32) + b1
    m = _gelu_tanh(m).astype(cdt)
    m = jnp.dot(m, w2_ref[...], preferred_element_type=jnp.float32) + b2

    h_out = h1 + m                                               # residual 2
    act_ref[...] = h_out

    @pl.when(l == n_layers - 1)
    def _():
        post = post_ref[...].astype(jnp.float32)                 # (2, D)
        y = _layernorm(h_out, post[0], post[1], eps)
        out_ref[...] = y.reshape(bblk, S, D).astype(out_ref.dtype)


# ----------------------------- wrappers ---------------------------------------
def extract_patches(pixels, patch_size):
    # Pure layout op (non-overlapping patches), done in the wrapper.
    # TODO(synk): the spec's Conv2d omits stride (default 1), contradicting its
    #   own num_patches computation; intended SigLip semantics
    #   (stride = patch_size, padding='valid') are implemented here.
    B, C, H, W = pixels.shape
    P = patch_size
    x = pixels.reshape(B, C, H // P, P, W // P, P)
    x = x.transpose(0, 2, 4, 1, 3, 5)                 # (B, Hp, Wp, C, P, P)
    return x.reshape(B, (H // P) * (W // P), C * P * P)


def _pick_batch_block(batch, seq, target_rows=256):
    """Batch-block size: fill >=256 MXU rows if possible, else keep >=2 blocks
    on the 'parallel' grid axis (v7x 2-TC sharding)."""
    divs = [d for d in range(1, batch + 1) if batch % d == 0]
    for d in divs:
        if d * seq >= target_rows:
            return d
    for d in reversed(divs):
        if batch // d >= 2:
            return d
    return batch


def _encoder_vmem_limit(bblk, S, D, I, H, w_itemsize):
    # 2x (double-buffered) per-layer weights + x/out blocks, plus the resident
    # activation, score tensor and rough temporaries; generous headroom.
    layer_w = (4 * D * D + 2 * D * I + 9 * D + I) * w_itemsize
    io_blocks = 2 * bblk * S * D * 4
    act = bblk * S * D * 4
    scores = bblk * H * S * S * 4
    tmps = 4 * bblk * S * max(D, I) * 4
    est = 2 * (layer_w + io_blocks) + act + scores + tmps
    return int(min(max(2 * est, 32 * 2 ** 20), 100 * 2 ** 20))


def patch_embed(patches, w_patch, b_patch, pos_emb, *, bblk):
    B, S, CPP = patches.shape
    D = w_patch.shape[1]
    return pl.pallas_call(
        patch_embed_kernel,
        out_shape=jax.ShapeDtypeStruct((B, S, D), jnp.float32),
        grid_spec=pltpu.PrefetchScalarGridSpec(
            num_scalar_prefetch=0,
            grid=(B // bblk,),
            in_specs=[
                pl.BlockSpec((bblk, S, CPP), lambda b: (b, 0, 0)),
                pl.BlockSpec((CPP, D), lambda b: (0, 0)),
                pl.BlockSpec((1, D), lambda b: (0, 0)),
                pl.BlockSpec((S, D), lambda b: (0, 0)),
            ],
            out_specs=pl.BlockSpec((bblk, S, D), lambda b: (b, 0, 0)),
        ),
        compiler_params=pltpu.CompilerParams(dimension_semantics=("parallel",)),
    )(patches, w_patch, b_patch, pos_emb)


def fused_encoder(x, layers, post, *, num_heads, eps, bblk):
    B, S, D = x.shape
    L, _, I = layers["w1"].shape

    kernel = functools.partial(encoder_stack_kernel,
                               num_heads=num_heads, eps=eps)

    def wspec(arr):
        return pl.BlockSpec((None,) + arr.shape[1:], lambda b, l: (l, 0, 0))

    in_specs = [
        pl.BlockSpec((bblk, S, D), lambda b, l: (b, 0, 0)),     # x
        wspec(layers["wq"]), wspec(layers["wk"]),
        wspec(layers["wv"]), wspec(layers["wo"]),
        wspec(layers["w1"]), wspec(layers["w2"]),
        wspec(layers["vecs"]),                                  # packed vectors
        wspec(layers["b1"]),
        pl.BlockSpec((2, D), lambda b, l: (0, 0)),              # post-LN params
    ]

    vmem_limit = _encoder_vmem_limit(bblk, S, D, I, num_heads,
                                     layers["wq"].dtype.itemsize)

    return pl.pallas_call(
        kernel,
        out_shape=jax.ShapeDtypeStruct((B, S, D), jnp.float32),
        grid_spec=pltpu.PrefetchScalarGridSpec(
            num_scalar_prefetch=0,
            grid=(B // bblk, L),              # batch-blocks outer, layers inner
            in_specs=in_specs,
            out_specs=pl.BlockSpec((bblk, S, D), lambda b, l: (b, 0, 0)),
            scratch_shapes=[pltpu.VMEM((bblk * S, D), jnp.float32)],
        ),
        compiler_params=pltpu.CompilerParams(
            dimension_semantics=("parallel", "arbitrary"),
            vmem_limit_bytes=vmem_limit),
    )(x, layers["wq"], layers["wk"], layers["wv"], layers["wo"],
      layers["w1"], layers["w2"], layers["vecs"], layers["b1"], post)


def siglip_vision_transformer(pixel_values, params, cfg):
    patches = extract_patches(pixel_values, cfg.patch_size)
    B, S, _ = patches.shape
    bblk = _pick_batch_block(B, S)
    embeds = patch_embed(patches, params["w_patch"], params["b_patch"],
                         params["pos"], bblk=bblk)
    return fused_encoder(embeds, params["layers"], params["post"],
                         num_heads=cfg.num_attn_heads,
                         eps=cfg.layer_norm_eps, bblk=bblk)


# ----------------------------- parameter init ---------------------------------
def init_params(key, cfg, dtype=jnp.bfloat16):
    D, I, L = cfg.hidden_size, cfg.intermediate_size, cfg.num_hidden_layers
    S = (cfg.image_size // cfg.patch_size) ** 2
    CPP = cfg.num_channels * cfg.patch_size * cfg.patch_size
    ks = iter(jax.random.split(key, 16))

    def rnd(shape, scale=0.02):
        return (jax.random.normal(next(ks), shape, jnp.float32) * scale
                ).astype(dtype)

    # Packed per-layer vectors: ln1_g, ln1_b, bq, bk, bv, bo, ln2_g, ln2_b, b2.
    vecs = jax.random.normal(next(ks), (L, 9, D), jnp.float32) * 0.02
    vecs = vecs.at[:, _LN1_G, :].add(1.0).at[:, _LN2_G, :].add(1.0)
    post = jax.random.normal(next(ks), (2, D), jnp.float32) * 0.01
    post = post.at[0].add(1.0)                                   # gamma, beta

    # Linear weights are stored pre-transposed to (in, out) so kernels do x @ W.
    # TODO(synk): loading a real PyTorch checkpoint requires reshaping the
    #   Conv2d kernel to (C*P*P, D) and transposing nn.Linear weights.
    layers = {
        "wq": rnd((L, D, D)), "wk": rnd((L, D, D)),
        "wv": rnd((L, D, D)), "wo": rnd((L, D, D)),
        "w1": rnd((L, D, I)), "w2": rnd((L, I, D)),
        "vecs": vecs.astype(dtype),
        "b1": rnd((L, 1, I)),
    }
    return {
        "w_patch": rnd((CPP, D)),
        "b_patch": rnd((1, D)),
        "pos": rnd((S, D)),
        "post": post.astype(dtype),
        "layers": layers,
    }


# ----------------------------- pure-JAX reference ------------------------------
def ref_model(pixel_values, params, cfg):
    # Float32 reference using the (bf16-rounded) parameter values.
    p = jax.tree_util.tree_map(lambda a: a.astype(jnp.float32), params)
    H, eps = cfg.num_attn_heads, cfg.layer_norm_eps

    def ln(v, g, b):
        mu = jnp.mean(v, -1, keepdims=True)
        var = jnp.mean((v - mu) ** 2, -1, keepdims=True)
        return (v - mu) / jnp.sqrt(var + eps) * g + b

    patches = extract_patches(pixel_values, cfg.patch_size)
    x = patches @ p["w_patch"] + p["b_patch"] + p["pos"]
    lp = p["layers"]
    B, S, D = x.shape
    hd = D // H
    scale = hd ** (-0.5)

    for l in range(lp["wq"].shape[0]):
        vec = lp["vecs"][l]
        h = ln(x, vec[_LN1_G], vec[_LN1_B])
        q = (h @ lp["wq"][l] + vec[_BQ]).reshape(B, S, H, hd)
        k = (h @ lp["wk"][l] + vec[_BK]).reshape(B, S, H, hd)
        v = (h @ lp["wv"][l] + vec[_BV]).reshape(B, S, H, hd)
        s = jnp.einsum("bqhd,bkhd->bhqk", q, k) * scale
        a = jax.nn.softmax(s, axis=-1)
        o = jnp.einsum("bhqk,bkhd->bqhd", a, v).reshape(B, S, D)
        x = x + (o @ lp["wo"][l] + vec[_BO])
        h2 = ln(x, vec[_LN2_G], vec[_LN2_B])
        m = jax.nn.gelu(h2 @ lp["w1"][l] + lp["b1"][l], approximate=True)
        x = x + (m @ lp["w2"][l] + vec[_B2])

    return ln(x, p["post"][0], p["post"][1])


# ----------------------------- main --------------------------------------------
if __name__ == "__main__":
    cfg = SigLipVisionConfig(hidden_size=128, intermediate_size=256,
                             num_hidden_layers=2, num_attn_heads=4,
                             num_channels=3, image_size=32, patch_size=8)
    B = 4
    key = jax.random.PRNGKey(0)
    pixel_values = jax.random.normal(
        key, (B, cfg.num_channels, cfg.image_size, cfg.image_size), jnp.float32)
    params = init_params(jax.random.fold_in(key, 1), cfg)

    out = siglip_vision_transformer(pixel_values, params, cfg)
    out = jax.block_until_ready(out)

    ref = ref_model(pixel_values, params, cfg)
    assert out.shape == ref.shape, (out.shape, ref.shape)
    # bf16 matmul/einsum operands vs f32 reference -> loosened tolerance.
    max_err = float(jnp.max(jnp.abs(out - ref)))
    assert jnp.allclose(out, ref, atol=5e-2, rtol=5e-2), \
        f"mismatch vs reference, max_abs_err={max_err}"

    print("KERNEL_OK")
</pallas_src>

<mosaic_0001>
module attributes {stable_mosaic.version = 11 : i64} {
  func.func @patch_embed_kernel(%arg0: i32, %arg1: memref<2x16x192xf32, #tpu.memory_space<vmem>>, %arg2: memref<192x128xbf16, #tpu.memory_space<vmem>>, %arg3: memref<1x128xbf16, #tpu.memory_space<vmem>>, %arg4: memref<16x128xbf16, #tpu.memory_space<vmem>>, %arg5: memref<2x16x128xf32, #tpu.memory_space<vmem>>) attributes {dimension_semantics = [#tpu.dimension_semantics<parallel>], iteration_bounds = array<i64: 2>, scalar_prefetch = 0 : i64, scratch_operands = 0 : i64, tpu.core_type = #tpu.core_type<tc>, window_params = [{transform_indices = @transform_0, window_bounds = array<i64: 2, 16, 192>}, {pipeline_mode = #tpu.pipeline_mode<synchronous>, transform_indices = @transform_1, window_bounds = array<i64: 192, 128>}, {pipeline_mode = #tpu.pipeline_mode<synchronous>, transform_indices = @transform_2, window_bounds = array<i64: 1, 128>}, {pipeline_mode = #tpu.pipeline_mode<synchronous>, transform_indices = @transform_3, window_bounds = array<i64: 16, 128>}, {transform_indices = @transform_4, window_bounds = array<i64: 2, 16, 128>}]} {
    %c0 = arith.constant 0 : index
    %c0_0 = arith.constant 0 : index
    %c0_1 = arith.constant 0 : index
    %0 = vector.load %arg1[%c0, %c0_0, %c0_1] : memref<2x16x192xf32, #tpu.memory_space<vmem>>, vector<2x16x192xf32>
    %1 = vector.shape_cast %0 : vector<2x16x192xf32> to vector<32x192xf32>
    %2 = arith.truncf %1 : vector<32x192xf32> to vector<32x192xbf16>
    %c0_2 = arith.constant 0 : index
    %c0_3 = arith.constant 0 : index
    %3 = vector.load %arg2[%c0_2, %c0_3] : memref<192x128xbf16, #tpu.memory_space<vmem>>, vector<192x128xbf16>
    %cst = arith.constant dense<0.000000e+00> : vector<32x128xf32>
    %4 = tpu.matmul %2, %3, %cst {dimension_numbers = #tpu.dot_dimension_numbers<[1], [0], [0], [1], [0, 0, 1, 1], [], []>} : vector<32x192xbf16>, vector<192x128xbf16>, vector<32x128xf32> -> vector<32x128xf32>
    %5 = vector.shape_cast %4 : vector<32x128xf32> to vector<2x16x128xf32>
    %c0_4 = arith.constant 0 : index
    %c0_5 = arith.constant 0 : index
    %6 = vector.load %arg3[%c0_4, %c0_5] : memref<1x128xbf16, #tpu.memory_space<vmem>>, vector<1x128xbf16>
    %7 = arith.extf %6 : vector<1x128xbf16> to vector<1x128xf32>
    %8 = vector.shape_cast %7 : vector<1x128xf32> to vector<1x1x128xf32>
    %9 = vector.broadcast %8 : vector<1x1x128xf32> to vector<2x16x128xf32>
    %10 = arith.addf %5, %9 : vector<2x16x128xf32>
    %c0_6 = arith.constant 0 : index
    %c0_7 = arith.constant 0 : index
    %11 = vector.load %arg4[%c0_6, %c0_7] : memref<16x128xbf16, #tpu.memory_space<vmem>>, vector<16x128xbf16>
    %12 = arith.extf %11 : vector<16x128xbf16> to vector<16x128xf32>
    %13 = vector.shape_cast %12 : vector<16x128xf32> to vector<1x16x128xf32>
    %14 = vector.broadcast %13 : vector<1x16x128xf32> to vector<2x16x128xf32>
    %15 = arith.addf %10, %14 : vector<2x16x128xf32>
    %c0_8 = arith.constant 0 : index
    %c0_9 = arith.constant 0 : index
    %c0_10 = arith.constant 0 : index
    %16 = vector.load %arg5[%c0_8, %c0_9, %c0_10] : memref<2x16x128xf32, #tpu.memory_space<vmem>>, vector<2x16x128xf32>
    tpu.vector_store %arg5[%c0_8, %c0_9, %c0_10], %15 {strides = array<i32>} : memref<2x16x128xf32, #tpu.memory_space<vmem>>, vector<2x16x128xf32>,
    return
  }
  func.func @transform_0(%arg0: i32) -> (i32, i32, i32) {
    %c0_i32 = arith.constant 0 : i32
    %c0_i32_0 = arith.constant 0 : i32
    %c0_i32_1 = arith.constant 0 : i32
    return %arg0, %c0_i32, %c0_i32_0 : i32, i32, i32
  }
  func.func @transform_1(%arg0: i32) -> (i32, i32) {
    %c0_i32 = arith.constant 0 : i32
    %c0_i32_0 = arith.constant 0 : i32
    %c0_i32_1 = arith.constant 0 : i32
    return %c0_i32, %c0_i32_0 : i32, i32
  }
  func.func @transform_2(%arg0: i32) -> (i32, i32) {
    %c0_i32 = arith.constant 0 : i32
    %c0_i32_0 = arith.constant 0 : i32
    %c0_i32_1 = arith.constant 0 : i32
    return %c0_i32, %c0_i32_0 : i32, i32
  }
  func.func @transform_3(%arg0: i32) -> (i32, i32) {
    %c0_i32 = arith.constant 0 : i32
    %c0_i32_0 = arith.constant 0 : i32
    %c0_i32_1 = arith.constant 0 : i32
    return %c0_i32, %c0_i32_0 : i32, i32
  }
  func.func @transform_4(%arg0: i32) -> (i32, i32, i32) {
    %c0_i32 = arith.constant 0 : i32
    %c0_i32_0 = arith.constant 0 : i32
    %c0_i32_1 = arith.constant 0 : i32
    return %arg0, %c0_i32, %c0_i32_0 : i32, i32, i32
  }
}

</mosaic_0001>

<llo_original>
// kernel: tpu_custom_call.1
$region0: #{tpu_custom_call.1}
  #allocation0 [shape = 'u32[]', space=smem, size = 0x4, offset = 0x4, fixed_abs, tag = 'smem constant byte address 0x4 - core index']
  #allocation1 [shape = 'u32[72,128]{1,0:T(1,128)}', space=vmem, size = 0x9000, scoped, tag = 'internal scratch']
  %s0 = inlined_call_operand.hbm [shape: f32[4,16,192], index: 0, kind: input, shape index: {}]
  %s1 = inlined_call_operand.hbm [shape: bf16[192,128], index: 1, kind: input, shape index: {}]
  %s2 = inlined_call_operand.vmem [shape: bf16[1,128], index: 2, kind: input, shape index: {}]
  %s3 = inlined_call_operand.hbm [shape: bf16[16,128], index: 3, kind: input, shape index: {}]
  %s4 = inlined_call_operand.hbm [shape: f32[4,16,128], index: 4, kind: output, shape index: {}]
  %s5 = sld [smem:[#allocation0]]
  $region61: #{tpu_custom_call.1} parent=0
    _
  %s7 = ssub.s32 1, %s5
  %s8 = scalar_select 0, %s7, %s5
  $region1: #{tpu_custom_call.1} parent=0
    #allocation2 [shape = 'u8[65536]{0}', space=vmem, size = 0x10000, scoped, tag = 'input window, operand 0']
    #allocation3 [shape = 's32[2]{0}', space=sflag, size = 0x8, scoped, tag = 'scoped memory for tpu_custom_call.1']
    #allocation4 [shape = 's32[2]{0}', space=sflag, size = 0x8, scoped, tag = 'scoped memory for tpu_custom_call.1']
    #allocation5 [shape = 'u8[49152]{0}', space=vmem, size = 0xc000, scoped, tag = 'input window, operand 1, single buffered']
    #allocation6 [shape = 's32[1]{0}', space=sflag, size = 0x4, scoped, tag = 'scoped memory for tpu_custom_call.1']
    #allocation7 [shape = 'u8[4096]{0}', space=vmem, size = 0x1000, scoped, tag = 'input window, operand 3, single buffered']
    #allocation8 [shape = 'u8[32768]{0}', space=vmem, size = 0x8000, scoped, tag = 'output window, operand 0']
    %9 = vsyncpa [#allocation3], 0
    %s10 = scalar_lea.sflag [#allocation3], 1
    %11 = vsyncpa %s10, 0
    %12 = vsyncpa [#allocation6], 0
    %13 = vsyncpa [#allocation4], 0
    %s14 = scalar_lea.sflag [#allocation4], 1
    %15 = vsyncpa %s14, 0
    loop: start=0, step=1, limit=4
    $region2: #{tpu_custom_call.1} parent=1 // loop_pre_header
      _
    $region3: #{tpu_custom_call.1} parent=1 // loop_header
      %s17 = sphi 0, %s21
      %p18 = scmp.ge.s32.totalorder %s17, 4
      %s27 = sphi 0, %s29
      %s30 = sphi 0, %s27
      %s31 = sphi 0, %s30
      %s47 = sphi 0, %s31
      %s51 = sphi 0, %s51
      %s53 = sphi 0, %s51
      %s54 = sphi 0, %s53
      %s68 = sphi 0, %s54
      %s72 = sphi 0, %s72
      %s74 = sphi 0, %s72
      %s75 = sphi 0, %s74
      %s89 = sphi 0, %s75
      %s93 = sphi 0, %s93
      %s95 = sphi 0, %s93
      %s96 = sphi 0, %s95
      %s110 = sphi 0, %s96
      %s116 = sphi 0, %s118
      %s119 = sphi 0, %s116
      %s120 = sphi 0, %s119
      %s136 = sphi 0, %s120
    $region4: #{tpu_custom_call.1} parent=1 // loop_header_branch
      %20 = sbr.rel (%p18) target = $region8
    $region5: #{tpu_custom_call.1} parent=1 // loop_body
      %s22 = ssub.s32 %s17, 1
      %s23 = ssub.s32 %s17, 2
      %s24 = sadd.s32 %s17, 1
      %s25 = ssub.s32 %s17, %s24
      %p26 = scmp.eq.s32.totalorder %s25, 0
      %s28 = sadd.s32 %s27, 1
      %s29 = scalar_select %p26, %s27, %s28
      %p32 = pneg %p26
      %p33 = scmp.eq.s32.totalorder %s17, 1
      %p34 = por %p32, %p33
      %p35 = scmp.ne.s32.totalorder %s27, %s30
      %p36 = scmp.eq.s32.totalorder %s17, 0
      %p37 = por %p35, %p36
      %p38 = scmp.ne.s32.totalorder %s27, %s30
      %p39 = scmp.eq.s32.totalorder %s22, 1
      %p40 = por %p38, %p39
      %p41 = scmp.ne.s32.totalorder %s30, %s31
      %p42 = scmp.eq.s32.totalorder %s22, 0
      %p43 = por %p41, %p42
      %p44 = scmp.ne.s32.totalorder %s30, %s31
      %p45 = scmp.eq.s32.totalorder %s23, 1
      %p46 = por %p44, %p45
      %p48 = scmp.ne.s32.totalorder %s31, %s47
      %p49 = scmp.eq.s32.totalorder %s23, 0
      %p50 = por %p48, %p49
      %s52 = sadd.s32 %s51, 1
      %p55 = scmp.eq.s32.totalorder %s17, 1
      %p56 = scmp.ne.s32.totalorder %s51, %s53
      %p57 = scmp.eq.s32.totalorder %s17, 0
      %p58 = por %p56, %p57
      %p59 = scmp.ne.s32.totalorder %s51, %s53
      %p60 = scmp.eq.s32.totalorder %s22, 1
      %p61 = por %p59, %p60
      %p62 = scmp.ne.s32.totalorder %s53, %s54
      %p63 = scmp.eq.s32.totalorder %s22, 0
      %p64 = por %p62, %p63
      %p65 = scmp.ne.s32.totalorder %s53, %s54
      %p66 = scmp.eq.s32.totalorder %s23, 1
      %p67 = por %p65, %p66
      %p69 = scmp.ne.s32.totalorder %s54, %s68
      %p70 = scmp.eq.s32.totalorder %s23, 0
      %p71 = por %p69, %p70
      %s73 = sadd.s32 %s72, 1
      %p76 = scmp.eq.s32.totalorder %s17, 1
      %p77 = scmp.ne.s32.totalorder %s72, %s74
      %p78 = scmp.eq.s32.totalorder %s17, 0
      %p79 = por %p77, %p78
      %p80 = scmp.ne.s32.totalorder %s72, %s74
      %p81 = scmp.eq.s32.totalorder %s22, 1
      %p82 = por %p80, %p81
      %p83 = scmp.ne.s32.totalorder %s74, %s75
      %p84 = scmp.eq.s32.totalorder %s22, 0
      %p85 = por %p83, %p84
      %p86 = scmp.ne.s32.totalorder %s74, %s75
      %p87 = scmp.eq.s32.totalorder %s23, 1
      %p88 = por %p86, %p87
      %p90 = scmp.ne.s32.totalorder %s75, %s89
      %p91 = scmp.eq.s32.totalorder %s23, 0
      %p92 = por %p90, %p91
      %s94 = sadd.s32 %s93, 1
      %p97 = scmp.eq.s32.totalorder %s17, 1
      %p98 = scmp.ne.s32.totalorder %s93, %s95
      %p99 = scmp.eq.s32.totalorder %s17, 0
      %p100 = por %p98, %p99
      %p101 = scmp.ne.s32.totalorder %s93, %s95
      %p102 = scmp.eq.s32.totalorder %s22, 1
      %p103 = por %p101, %p102
      %p104 = scmp.ne.s32.totalorder %s95, %s96
      %p105 = scmp.eq.s32.totalorder %s22, 0
      %p106 = por %p104, %p105
      %p107 = scmp.ne.s32.totalorder %s95, %s96
      %p108 = scmp.eq.s32.totalorder %s23, 1
      %p109 = por %p107, %p108
      %p111 = scmp.ne.s32.totalorder %s96, %s110
      %p112 = scmp.eq.s32.totalorder %s23, 0
      %p113 = por %p111, %p112
      %s114 = ssub.s32 %s17, %s24
      %p115 = scmp.eq.s32.totalorder %s114, 0
      %s117 = sadd.s32 %s116, 1
      %s118 = scalar_select %p115, %s116, %s117
      %p121 = pneg %p115
      %p122 = scmp.eq.s32.totalorder %s17, 1
      %p123 = por %p121, %p122
      %p124 = scmp.ne.s32.totalorder %s116, %s119
      %p125 = scmp.eq.s32.totalorder %s17, 0
      %p126 = por %p124, %p125
      %p127 = scmp.ne.s32.totalorder %s116, %s119
      %p128 = scmp.eq.s32.totalorder %s22, 1
      %p129 = por %p127, %p128
      %p130 = scmp.ne.s32.totalorder %s119, %s120
      %p131 = scmp.eq.s32.totalorder %s22, 0
      %p132 = por %p130, %p131
      %p133 = scmp.ne.s32.totalorder %s119, %s120
      %p134 = scmp.eq.s32.totalorder %s23, 1
      %p135 = por %p133, %p134
      %p137 = scmp.ne.s32.totalorder %s120, %s136
      %p138 = scmp.eq.s32.totalorder %s23, 0
      %p139 = por %p137, %p138
      %p140 = scmp.le.s32.totalorder 1, %s17
      %p141 = scmp.lt.s32.totalorder %s17, 3
      %p142 = pnand %p140, %p141
      %p143 = pneg %p142
      // Predicated region
      $region9: #{tpu_custom_call.1} parent=5 // pred_check
        _
      $region10: #{tpu_custom_call.1} parent=5 // pred_check_branch
        %145 = sbr.rel (%p142) target = $region12
      $region11: #{tpu_custom_call.1} parent=5 // pred_region
        %s146 = ssub.s32 %s17, 1
        // Predicated region
        $region13: #{tpu_custom_call.1} parent=11 // pred_check
          %p147 = pneg %p64
        $region14: #{tpu_custom_call.1} parent=11 // pred_check_branch
          %149 = sbr.rel (%p147) target = $region16
        $region15: #{tpu_custom_call.1} parent=11 // pred_region
          %151 = vsyncadd [#allocation6], 0
          %s152 = sshll.u32 %s1, 4
          %s153 = int_to_ptr.hbm [resolvable:$true] %s152
          %s154 = sshll.u32 [#allocation5], 4
          %s155 = int_to_ptr.vmem [resolvable:$true] %s154
          %160 = dma.hbm_to_vmem [thread:$0]  %s153, 1536, %s155, [#allocation6], 64, 64, 4
        $region16: #{tpu_custom_call.1} parent=11 // pred_fallthru
          _
        // Predicated region
        $region17: #{tpu_custom_call.1} parent=11 // pred_check
          %p161 = pneg %p85
        $region18: #{tpu_custom_call.1} parent=11 // pred_check_branch
          %163 = sbr.rel (%p161) target = $region20
        $region19: #{tpu_custom_call.1} parent=11 // pred_region
          _
        $region20: #{tpu_custom_call.1} parent=11 // pred_fallthru
          _
        // Predicated region
        $region21: #{tpu_custom_call.1} parent=11 // pred_check
          %p164 = pneg %p106
        $region22: #{tpu_custom_call.1} parent=11 // pred_check_branch
          %166 = sbr.rel (%p164) target = $region24
        $region23: #{tpu_custom_call.1} parent=11 // pred_region
          %168 = vsyncadd [#allocation6], 0
          %s169 = sshll.u32 %s3, 4
          %s170 = int_to_ptr.hbm [resolvable:$true] %s169
          %s171 = sshll.u32 [#allocation7], 4
          %s172 = int_to_ptr.vmem [resolvable:$true] %s171
          %177 = dma.hbm_to_vmem [thread:$0]  %s170, 128, %s172, [#allocation6], 64, 64, 4
        $region24: #{tpu_custom_call.1} parent=11 // pred_fallthru
          _
      $region12: #{tpu_custom_call.1} parent=5 // pred_fallthru
        _
      %p178 = scmp.lt.s32.totalorder %s17, 2
      // Predicated region
      $region25: #{tpu_custom_call.1} parent=5 // pred_check
        %p179 = pneg %p178
      $region26: #{tpu_custom_call.1} parent=5 // pred_check_branch
        %181 = sbr.rel (%p179) target = $region28
      $region27: #{tpu_custom_call.1} parent=5 // pred_region
        // Predicated region
        $region29: #{tpu_custom_call.1} parent=27 // pred_check
          %p182 = pneg %p37
        $region30: #{tpu_custom_call.1} parent=27 // pred_check_branch
          %184 = sbr.rel (%p182) target = $region32
        $region31: #{tpu_custom_call.1} parent=27 // pred_region
          %s185 = sand.u32 %s27, 1
          %s186 = scalar_lea.sflag [#allocation3], %s185
          %s187 = sand.u32 %s27, 1
          %s188 = smul.addr %s187, 64
          %s189 = scalar_lea.vmem [#allocation2], %s188
          %s190 = smul.u32 2, %s17
          %192 = vsyncadd %s186, 0
          %s193 = smul.addr %s190, 4
          %s194 = smul.addr %s193, 8
          %s195 = scalar_lea.hbm %s0, %s194
          %s196 = sshll.u32 %s195, 4
          %s197 = int_to_ptr.hbm [resolvable:$true] %s196
          %s198 = sshll.u32 %s189, 4
          %s199 = int_to_ptr.vmem [resolvable:$true] %s198
          %204 = dma.hbm_to_vmem [thread:$0]  %s197, 1024, %s199, %s186, 256, 256, 16
        $region32: #{tpu_custom_call.1} parent=27 // pred_fallthru
          _
      $region28: #{tpu_custom_call.1} parent=5 // pred_fallthru
        _
      %p205 = scmp.le.s32.totalorder 1, %s17
      %p206 = scmp.lt.s32.totalorder %s17, 3
      %p207 = pnand %p205, %p206
      %p208 = pneg %p207
      // Predicated region
      $region33: #{tpu_custom_call.1} parent=5 // pred_check
        _
      $region34: #{tpu_custom_call.1} parent=5 // pred_check_branch
        %210 = sbr.rel (%p207) target = $region36
      $region35: #{tpu_custom_call.1} parent=5 // pred_region
        %s211 = ssub.s32 %s17, 1
        %s212 = sand.u32 %s30, 1
        %s213 = scalar_lea.sflag [#allocation3], %s212
        %s214 = sand.u32 %s30, 1
        %s215 = smul.addr %s214, 64
        %s216 = scalar_lea.vmem [#allocation2], %s215
        // Predicated region
        $region37: #{tpu_custom_call.1} parent=35 // pred_check
          %p217 = pneg %p43
        $region38: #{tpu_custom_call.1} parent=35 // pred_check_branch
          %219 = sbr.rel (%p217) target = $region40
        $region39: #{tpu_custom_call.1} parent=35 // pred_region
          %221 = dma.done %s213, 1024
        $region40: #{tpu_custom_call.1} parent=35 // pred_fallthru
          _
        // Predicated region
        $region41: #{tpu_custom_call.1} parent=35 // pred_check
          %p222 = pneg %p64
        $region42: #{tpu_custom_call.1} parent=35 // pred_check_branch
          %224 = sbr.rel (%p222) target = $region44
        $region43: #{tpu_custom_call.1} parent=35 // pred_region
          %226 = dma.done [#allocation6], 1536
        $region44: #{tpu_custom_call.1} parent=35 // pred_fallthru
          _
        // Predicated region
        $region45: #{tpu_custom_call.1} parent=35 // pred_check
          %p227 = pneg %p106
        $region46: #{tpu_custom_call.1} parent=35 // pred_check_branch
          %229 = sbr.rel (%p227) target = $region48
        $region47: #{tpu_custom_call.1} parent=35 // pred_region
          %231 = dma.done [#allocation6], 128
        $region48: #{tpu_custom_call.1} parent=35 // pred_fallthru
          _
        %s232 = sand.u32 %s30, 1
        %s233 = scalar_lea.sflag [#allocation3], %s232
        %s234 = sand.u32 %s30, 1
        %s235 = smul.addr %s234, 64
        %s236 = scalar_lea.vmem [#allocation2], %s235
        %p237 = pneg %p43
        %p238 = pneg %p40
        %p239 = pneg %p64
        %p240 = pneg %p61
        %p241 = pneg %p85
        %p242 = pneg %p82
        %p243 = pneg %p106
        %p244 = pneg %p103
        %p245 = pneg %p132
        %p246 = pneg %p129
        %s247 = sand.u32 %s119, 1
        %s248 = scalar_lea.sflag [#allocation4], %s247
        %s249 = sand.u32 %s119, 1
        %s250 = smul.addr %s249, 32
        %s251 = scalar_lea.vmem [#allocation8], %s250
        %s252 = smul.u32 2, %s22
        %s253 = smul.u32 2, %s22
        %v255 = vld [vmem:[%s216] sm:$0xff]
        %v256 = vld [vmem:[%s216 + $0x8] sm:$0xff]
        %v257 = vld [vmem:[%s216 + $0x10] sm:$0xff]
        %v258 = vld [vmem:[%s216 + $0x18] sm:$0xff]
        %v259 = vld [vmem:[%s216 + $0x20] sm:$0xff]
        %v260 = vld [vmem:[%s216 + $0x28] sm:$0xff]
        %v261 = vld [vmem:[%s216 + $0x30] sm:$0xff]
        %v262 = vld [vmem:[%s216 + $0x38] sm:$0xff]
        %v263 = vpack.c.bf16 %v257, %v255
        %v264 = vpack.c.bf16 %v258, %v256
        %v265 = vpack.c.bf16 %v261, %v259
        %v266 = vpack.c.bf16 %v262, %v260
        %v267 = vld [vmem:[#allocation5] sm:$0xf]
        %v268 = vld [vmem:[#allocation5 + $0x4] sm:$0xf]
        %v269 = vld [vmem:[#allocation5 + $0x8] sm:$0xf]
        %v270 = vld [vmem:[#allocation5 + $0xc] sm:$0xf]
        %v271 = vld [vmem:[#allocation5 + $0x10] sm:$0xf]
        %v272 = vld [vmem:[#allocation5 + $0x14] sm:$0xf]
        %v273 = vld [vmem:[#allocation5 + $0x18] sm:$0xf]
        %v274 = vld [vmem:[#allocation5 + $0x1c] sm:$0xf]
        %v275 = vld [vmem:[#allocation5 + $0x20] sm:$0xf]
        %v276 = vld [vmem:[#allocation5 + $0x24] sm:$0xf]
        %v277 = vld [vmem:[#allocation5 + $0x28] sm:$0xf]
        %v278 = vld [vmem:[#allocation5 + $0x2c] sm:$0xf]
        %v279 = vld [vmem:[#allocation5 + $0x30] sm:$0xf]
        %v280 = vld [vmem:[#allocation5 + $0x34] sm:$0xf]
        %v281 = vld [vmem:[#allocation5 + $0x38] sm:$0xf]
        %v282 = vld [vmem:[#allocation5 + $0x3c] sm:$0xf]
        %v283 = vld [vmem:[#allocation5 + $0x40] sm:$0xf]
        %v284 = vld [vmem:[#allocation5 + $0x44] sm:$0xf]
        %v285 = vld [vmem:[#allocation5 + $0x48] sm:$0xf]
        %v286 = vld [vmem:[#allocation5 + $0x4c] sm:$0xf]
        %v287 = vld [vmem:[#allocation5 + $0x50] sm:$0xf]
        %v288 = vld [vmem:[#allocation5 + $0x54] sm:$0xf]
        %v289 = vld [vmem:[#allocation5 + $0x58] sm:$0xf]
        %v290 = vld [vmem:[#allocation5 + $0x5c] sm:$0xf]
        %v315 = vunpack.c.l.b16 %v267
        %v316 = vunpack.c.l.b16 %v268
        %v317 = vunpack.c.l.b16 %v269
        %v318 = vunpack.c.l.b16 %v270
        %v319 = vunpack.c.l.b16 %v271
        %v320 = vunpack.c.l.b16 %v272
        %v321 = vunpack.c.l.b16 %v273
        %v322 = vunpack.c.l.b16 %v274
        %v323 = vunpack.c.l.b16 %v275
        %v324 = vunpack.c.l.b16 %v276
        %v325 = vunpack.c.l.b16 %v277
        %v326 = vunpack.c.l.b16 %v278
        %v327 = vunpack.c.l.b16 %v279
        %v328 = vunpack.c.l.b16 %v280
        %v329 = vunpack.c.l.b16 %v281
        %v330 = vunpack.c.l.b16 %v282
        %v331 = vunpack.c.l.b16 %v283
        %v332 = vunpack.c.l.b16 %v284
        %v333 = vunpack.c.l.b16 %v285
        %v334 = vunpack.c.l.b16 %v286
        %v335 = vunpack.c.l.b16 %v287
        %v336 = vunpack.c.l.b16 %v288
        %v337 = vunpack.c.l.b16 %v289
        %v338 = vunpack.c.l.b16 %v290
        %v339 = vpack.c.b16 %v316, %v315
        %v340 = vpack.c.b16 %v318, %v317
        %v341 = vpack.c.b16 %v320, %v319
        %v342 = vpack.c.b16 %v322, %v321
        %v343 = vpack.c.b16 %v324, %v323
        %v344 = vpack.c.b16 %v326, %v325
        %v345 = vpack.c.b16 %v328, %v327
        %v346 = vpack.c.b16 %v330, %v329
        %v347 = vpack.c.b16 %v332, %v331
        %v348 = vpack.c.b16 %v334, %v333
        %v349 = vpack.c.b16 %v336, %v335
        %v350 = vpack.c.b16 %v338, %v337
        %vm363 = vcmask 523264
        %v365 = vsel %vm363, %v264, 0
        %v368 = vsel %vm363, %v266, 0
        %370 = vmatpush.bf16.msra.mxu0 %v346
        %371 = vmatpush.bf16.msra.mxu0 %v345
        %372 = vmatpush.bf16.msra.mxu0 %v344
        %373 = vmatpush.bf16.msra.mxu0 %v343
        %374 = vmatpush.bf16.msra.mxu0 %v342
        %375 = vmatpush.bf16.msra.mxu0 %v341
        %376 = vmatpush.bf16.msra.mxu0 %v340
        %377 = vmatpush.bf16.msra.mxu0 %v339
        %378 = vmatmul.bf16.gmra.mxu0 %v263
        %v379 = vpop.f32.mrf.mxu0
        %v380 = vadd.f32 0.0, %v379
        %v381 = vpop.f32.mrf.mxu0
        %v382 = vadd.f32 0.0, %v381
        %383 = vmatmul.bf16.gmra.mxu0 %v265
        %v384 = vpop.f32.mrf.mxu0
        %v385 = vadd.f32 0.0, %v384
        %v386 = vpop.f32.mrf.mxu0
        %v387 = vadd.f32 0.0, %v386
        %388 = vdwg.mxu0
        %389 = vmatpush.bf16.msra.mxu0 0
        %390 = vmatpush.bf16.msra.mxu0 0
        %391 = vmatpush.bf16.msra.mxu0 0
        %392 = vmatpush.bf16.msra.mxu0 0
        %393 = vmatpush.bf16.msra.mxu0 %v350
        %394 = vmatpush.bf16.msra.mxu0 %v349
        %395 = vmatpush.bf16.msra.mxu0 %v348
        %396 = vmatpush.bf16.msra.mxu0 %v347
        %397 = vmatmul.bf16.gmra.mxu0 %v365
        %v398 = vpop.f32.mrf.mxu0
        %v399 = vadd.f32 %v380, %v398
        %v400 = vpop.f32.mrf.mxu0
        %v401 = vadd.f32 %v382, %v400
        %402 = vmatmul.bf16.gmra.mxu0 %v368
        %v403 = vpop.f32.mrf.mxu0
        %v404 = vadd.f32 %v385, %v403
        %v405 = vpop.f32.mrf.mxu0
        %v406 = vadd.f32 %v387, %v405
        %407 = vdwg.mxu0
        %v408 = vld [vmem:[%s2] sm:$0x1]
        %v409 = vunpack.c.l.bf16 %v408
        %v410 = vperm.slane %v409, 0
        %v411 = vadd.f32 %v399, %v410
        %v412 = vadd.f32 %v401, %v410
        %v413 = vadd.f32 %v404, %v410
        %v414 = vadd.f32 %v406, %v410
        %v415 = vld [vmem:[#allocation7] sm:$0xf]
        %v416 = vld [vmem:[#allocation7 + $0x4] sm:$0xf]
        %v417 = vunpack.c.l.bf16 %v415
        %v418 = vunpack.c.l.bf16 %v416
        %v419 = vadd.f32 %v411, %v417
        %v420 = vadd.f32 %v412, %v418
        %v421 = vadd.f32 %v413, %v417
        %v422 = vadd.f32 %v414, %v418
        %423 = vst [vmem:[%s251] sm:$0xff] %v419
        %424 = vst [vmem:[%s251 + $0x8] sm:$0xff] %v420
        %425 = vst [vmem:[%s251 + $0x10] sm:$0xff] %v421
        %426 = vst [vmem:[%s251 + $0x18] sm:$0xff] %v422
        %s427 = sand.u32 %s119, 1
        %s428 = scalar_lea.sflag [#allocation4], %s427
        %s429 = sand.u32 %s119, 1
        %s430 = smul.addr %s429, 32
        %s431 = scalar_lea.vmem [#allocation8], %s430
        // Predicated region
        $region49: #{tpu_custom_call.1} parent=35 // pred_check
          %p432 = pneg %p129
        $region50: #{tpu_custom_call.1} parent=35 // pred_check_branch
          %434 = sbr.rel (%p432) target = $region52
        $region51: #{tpu_custom_call.1} parent=35 // pred_region
          %s435 = smul.u32 2, %s22
          %437 = vsyncadd %s428, 0
          %s438 = smul.addr %s435, 2
          %s439 = smul.addr %s438, 8
          %s440 = scalar_lea.hbm %s4, %s439
          %s441 = sshll.u32 %s431, 4
          %s442 = int_to_ptr.vmem [resolvable:$true] %s441
          %s443 = sshll.u32 %s440, 4
          %s444 = int_to_ptr.hbm [resolvable:$true] %s443
          %449 = dma.vmem_to_hbm [thread:$0]  %s442, 512, %s444, %s428, 128, 128, 8
        $region52: #{tpu_custom_call.1} parent=35 // pred_fallthru
          _
      $region36: #{tpu_custom_call.1} parent=5 // pred_fallthru
        _
      %p450 = scmp.le.s32.totalorder 2, %s17
      // Predicated region
      $region53: #{tpu_custom_call.1} parent=5 // pred_check
        %p451 = pneg %p450
      $region54: #{tpu_custom_call.1} parent=5 // pred_check_branch
        %453 = sbr.rel (%p451) target = $region56
      $region55: #{tpu_custom_call.1} parent=5 // pred_region
        %s454 = ssub.s32 %s17, 2
        // Predicated region
        $region57: #{tpu_custom_call.1} parent=55 // pred_check
          %p455 = pneg %p135
        $region58: #{tpu_custom_call.1} parent=55 // pred_check_branch
          %457 = sbr.rel (%p455) target = $region60
        $region59: #{tpu_custom_call.1} parent=55 // pred_region
          %s458 = sand.u32 %s120, 1
          %s459 = scalar_lea.sflag [#allocation4], %s458
          %s460 = sand.u32 %s120, 1
          %s461 = smul.addr %s460, 32
          %s462 = scalar_lea.vmem [#allocation8], %s461
          %464 = dma.done %s459, 512
        $region60: #{tpu_custom_call.1} parent=55 // pred_fallthru
          _
      $region56: #{tpu_custom_call.1} parent=5 // pred_fallthru
        _
    $region6: #{tpu_custom_call.1} parent=1 // loop_footer
      %s21 = sadd.s32 1, %s17
    $region7: #{tpu_custom_call.1} parent=1 // loop_footer_branch
      %16 = sbr.rel target = $region3
    $region8: #{tpu_custom_call.1} parent=1 // loop_exit
      _
    %465 = vsyncpa [#allocation3], 1
    %s466 = scalar_lea.sflag [#allocation3], 1
    %467 = vsyncpa %s466, 1
    %468 = vsyncpa [#allocation6], 1
    %469 = vsyncpa [#allocation4], 1
    %s470 = scalar_lea.sflag [#allocation4], 1
    %471 = vsyncpa %s470, 1

</llo_original>
